<compile_context>
chip_gen: v7x
topology: tpu7x:2x2x1
jax: 0.10.0
libtpu: 0.0.40
codegen_flags: <defaults>
</compile_context>

<pallas_src>
import jax
import jax.numpy as jnp
from jax.experimental import pallas as pl
from jax.experimental.pallas import tpu as pltpu

PARAM_COUNT = 16
H1 = 32
H2 = 32
OUT = 18

MAX_TILE_B = 4096  # rows per grid step (multiple of 8); ~8 MiB VMEM w/ double-buffering


def fused_affine_kernel(x_ref, w_ref, b_ref, o_ref):
    # Single fused layer: y = x @ W + b.
    # x tile: (TB, PARAM_COUNT), W: (PARAM_COUNT, OUT), b: (1, OUT), out tile: (TB, OUT).
    acc = jnp.dot(x_ref[...], w_ref[...], preferred_element_type=jnp.float32)
    o_ref[...] = (acc + b_ref[...]).astype(o_ref.dtype)


def _round_up(n, m):
    return ((n + m - 1) // m) * m


def model_forward(x, params):
    w1, b1, w2, b2, w3, b3 = params

    # Exact algebraic fusion of the three affine layers (done once, in f32, outside the kernel).
    w_fused = (w1.astype(jnp.float32) @ w2.astype(jnp.float32)) @ w3.astype(jnp.float32)
    b_fused = (b1.astype(jnp.float32) @ w2.astype(jnp.float32) + b2.astype(jnp.float32)) \
              @ w3.astype(jnp.float32) + b3.astype(jnp.float32)

    B = x.shape[0]

    # Batch tile: multiple of 8, capped, and split so the grid has >= 2 steps for
    # mid/large batches (keeps both v7x TensorCores busy). No padding of x: the
    # grid uses cdiv and Pallas masks the partial last block's writeback.
    tb = min(MAX_TILE_B, _round_up(pl.cdiv(B, 2), 8))
    grid = (pl.cdiv(B, tb),)

    itemsize = jnp.dtype(x.dtype).itemsize
    cost = pl.CostEstimate(
        flops=2 * B * PARAM_COUNT * OUT,
        transcendentals=0,
        bytes_accessed=B * (PARAM_COUNT + OUT) * itemsize
        + (PARAM_COUNT * OUT + OUT) * 4,
    )

    out = pl.pallas_call(
        fused_affine_kernel,
        out_shape=jax.ShapeDtypeStruct((B, OUT), x.dtype),
        grid_spec=pltpu.PrefetchScalarGridSpec(
            num_scalar_prefetch=0,
            grid=grid,
            in_specs=[
                pl.BlockSpec((tb, PARAM_COUNT), lambda i: (i, 0)),   # x tiles stream
                pl.BlockSpec((PARAM_COUNT, OUT), lambda i: (0, 0)),  # fused W resident
                pl.BlockSpec((1, OUT), lambda i: (0, 0)),            # fused b resident
            ],
            out_specs=pl.BlockSpec((tb, OUT), lambda i: (i, 0)),
        ),
        compiler_params=pltpu.CompilerParams(
            dimension_semantics=("parallel",),      # shard batch tiles over v7x's 2 TCs
            vmem_limit_bytes=32 * 1024 * 1024,      # headroom on v5e (16 MiB default) and v7x
        ),
        cost_estimate=cost,
    )(x, w_fused, b_fused)

    return out


def init_params(key):
    # Deterministic init mimicking torch.nn.Linear default:
    # uniform(-1/sqrt(fan_in), 1/sqrt(fan_in)).
    def linear_init(k, fan_in, fan_out):
        kw, kb = jax.random.split(k)
        bound = 1.0 / jnp.sqrt(jnp.float32(fan_in))
        w = jax.random.uniform(kw, (fan_in, fan_out), jnp.float32, -bound, bound)
        b = jax.random.uniform(kb, (1, fan_out), jnp.float32, -bound, bound)
        return w, b

    k1, k2, k3 = jax.random.split(key, 3)
    w1, b1 = linear_init(k1, PARAM_COUNT, H1)
    w2, b2 = linear_init(k2, H1, H2)
    w3, b3 = linear_init(k3, H2, OUT)
    return (w1, b1, w2, b2, w3, b3)


def reference_forward(x, params):
    # Unfused reference: matches the PyTorch module layer-by-layer.
    w1, b1, w2, b2, w3, b3 = params
    h = x.astype(jnp.float32) @ w1 + b1
    h = h @ w2 + b2
    return h @ w3 + b3


if __name__ == "__main__":
    key = jax.random.PRNGKey(0)
    kx, kp = jax.random.split(key)
    params = init_params(kp)

    # Small, tile-aligned batch.
    batch = 8
    x = jax.random.normal(kx, (batch, PARAM_COUNT), dtype=jnp.float32)
    out = jax.block_until_ready(model_forward(x, params))
    ref = reference_forward(x, params)
    assert out.shape == (batch, OUT), out.shape
    # Weight fusion changes the fp rounding order vs the layer-by-layer reference,
    # so use a slightly looser tolerance.
    assert jnp.allclose(out, ref, atol=1e-4, rtol=1e-4), "mismatch vs reference (batch=8)"

    # Ragged batch: exercises the cdiv grid + masked partial last block (no pad/slice in wrapper).
    batch2 = 20
    x2 = jax.random.normal(jax.random.PRNGKey(1), (batch2, PARAM_COUNT), dtype=jnp.float32)
    out2 = jax.block_until_ready(model_forward(x2, params))
    ref2 = reference_forward(x2, params)
    assert out2.shape == (batch2, OUT), out2.shape
    assert jnp.allclose(out2, ref2, atol=1e-4, rtol=1e-4), "mismatch vs reference (batch=20)"

    print("KERNEL_OK")
</pallas_src>

<mosaic_0001>
module attributes {stable_mosaic.version = 11 : i64} {
  func.func @fused_affine_kernel(%arg0: i32, %arg1: memref<8x16xf32, #tpu.memory_space<vmem>>, %arg2: memref<16x18xf32, #tpu.memory_space<vmem>>, %arg3: memref<1x18xf32, #tpu.memory_space<vmem>>, %arg4: memref<8x18xf32, #tpu.memory_space<vmem>>) attributes {dimension_semantics = [#tpu.dimension_semantics<parallel>], iteration_bounds = array<i64: 1>, scalar_prefetch = 0 : i64, scratch_operands = 0 : i64, tpu.core_type = #tpu.core_type<tc>, window_params = [{transform_indices = @transform_0, window_bounds = array<i64: 8, 16>}, {pipeline_mode = #tpu.pipeline_mode<synchronous>, transform_indices = @transform_1, window_bounds = array<i64: 16, 18>}, {pipeline_mode = #tpu.pipeline_mode<synchronous>, transform_indices = @transform_2, window_bounds = array<i64: 1, 18>}, {transform_indices = @transform_3, window_bounds = array<i64: 8, 18>}]} {
    %c0 = arith.constant 0 : index
    %c0_0 = arith.constant 0 : index
    %0 = vector.load %arg1[%c0, %c0_0] : memref<8x16xf32, #tpu.memory_space<vmem>>, vector<8x16xf32>
    %c0_1 = arith.constant 0 : index
    %c0_2 = arith.constant 0 : index
    %1 = vector.load %arg2[%c0_1, %c0_2] : memref<16x18xf32, #tpu.memory_space<vmem>>, vector<16x18xf32>
    %cst = arith.constant dense<0.000000e+00> : vector<8x18xf32>
    %2 = tpu.matmul %0, %1, %cst {dimension_numbers = #tpu.dot_dimension_numbers<[1], [0], [0], [1], [0, 0, 1, 1], [], []>} : vector<8x16xf32>, vector<16x18xf32>, vector<8x18xf32> -> vector<8x18xf32>
    %c0_3 = arith.constant 0 : index
    %c0_4 = arith.constant 0 : index
    %3 = vector.load %arg3[%c0_3, %c0_4] : memref<1x18xf32, #tpu.memory_space<vmem>>, vector<1x18xf32>
    %4 = vector.broadcast %3 : vector<1x18xf32> to vector<8x18xf32>
    %5 = arith.addf %2, %4 : vector<8x18xf32>
    %c0_5 = arith.constant 0 : index
    %c0_6 = arith.constant 0 : index
    %6 = vector.load %arg4[%c0_5, %c0_6] : memref<8x18xf32, #tpu.memory_space<vmem>>, vector<8x18xf32>
    tpu.vector_store %arg4[%c0_5, %c0_6], %5 {strides = array<i32>} : memref<8x18xf32, #tpu.memory_space<vmem>>, vector<8x18xf32>,
    return
  }
  func.func @transform_0(%arg0: i32) -> (i32, i32) {
    %c0_i32 = arith.constant 0 : i32
    %c0_i32_0 = arith.constant 0 : i32
    return %arg0, %c0_i32 : i32, i32
  }
  func.func @transform_1(%arg0: i32) -> (i32, i32) {
    %c0_i32 = arith.constant 0 : i32
    %c0_i32_0 = arith.constant 0 : i32
    %c0_i32_1 = arith.constant 0 : i32
    return %c0_i32, %c0_i32_0 : i32, i32
  }
  func.func @transform_2(%arg0: i32) -> (i32, i32) {
    %c0_i32 = arith.constant 0 : i32
    %c0_i32_0 = arith.constant 0 : i32
    %c0_i32_1 = arith.constant 0 : i32
    return %c0_i32, %c0_i32_0 : i32, i32
  }
  func.func @transform_3(%arg0: i32) -> (i32, i32) {
    %c0_i32 = arith.constant 0 : i32
    %c0_i32_0 = arith.constant 0 : i32
    return %arg0, %c0_i32 : i32, i32
  }
}

</mosaic_0001>

<llo_original>
// kernel: tpu_custom_call.1
$region0: #{tpu_custom_call.1}
  #allocation0 [shape = 'u32[]', space=smem, size = 0x4, offset = 0x4, fixed_abs, tag = 'smem constant byte address 0x4 - core index']
  #allocation1 [shape = 'u32[144,128]{1,0:T(1,128)}', space=vmem, size = 0x12000, scoped, tag = 'internal scratch']
  %s0 = inlined_call_operand.hbm [shape: f32[8,16], index: 0, kind: input, shape index: {}]
  %s1 = inlined_call_operand.hbm [shape: f32[16,18], index: 1, kind: input, shape index: {}]
  %s2 = inlined_call_operand.vmem [shape: f32[1,18], index: 2, kind: input, shape index: {}]
  %s3 = inlined_call_operand.hbm [shape: f32[8,18], index: 3, kind: output, shape index: {}]
  %s4 = sld [smem:[#allocation0]]
  $region30: #{tpu_custom_call.1} parent=0
    _
  %s6 = ssub.s32 1, %s4
  %s7 = scalar_select 0, %s6, %s4
  $region1: #{tpu_custom_call.1} parent=0
    #allocation2 [shape = 'u8[4096]{0}', space=vmem, size = 0x1000, scoped, tag = 'input window, operand 0, single buffered']
    #allocation3 [shape = 's32[1]{0}', space=sflag, size = 0x4, scoped, tag = 'scoped memory for tpu_custom_call.1']
    #allocation4 [shape = 's32[1]{0}', space=sflag, size = 0x4, scoped, tag = 'scoped memory for tpu_custom_call.1']
    #allocation5 [shape = 'u8[8192]{0}', space=vmem, size = 0x2000, scoped, tag = 'input window, operand 1, single buffered']
    #allocation6 [shape = 's32[1]{0}', space=sflag, size = 0x4, scoped, tag = 'scoped memory for tpu_custom_call.1']
    #allocation7 [shape = 'u8[4096]{0}', space=vmem, size = 0x1000, scoped, tag = 'output window, operand 0, single buffered']
    %8 = vsyncpa [#allocation3], 0
    %9 = vsyncpa [#allocation6], 0
    %10 = vsyncpa [#allocation4], 0
    // Predicated region
    $region2: #{tpu_custom_call.1} parent=1 // pred_check
      _
    $region3: #{tpu_custom_call.1} parent=1 // pred_check_branch
      %12 = sbr.rel (0) target = $region5
    $region4: #{tpu_custom_call.1} parent=1 // pred_region
      %s14 = ssub.s32 128, 128
      %15 = vsyncadd [#allocation3], %s14
      %s17 = sshll.u32 [#allocation2], 4
      %s18 = int_to_ptr.vmem [resolvable:$true] %s17
      %20 = dma.hbm_to_vmem [thread:$0]  %s0, 128, %s18, [#allocation3]
    $region5: #{tpu_custom_call.1} parent=1 // pred_fallthru
      _
    // Predicated region
    $region6: #{tpu_custom_call.1} parent=1 // pred_check
      _
    $region7: #{tpu_custom_call.1} parent=1 // pred_check_branch
      %22 = sbr.rel (0) target = $region9
    $region8: #{tpu_custom_call.1} parent=1 // pred_region
      %s24 = ssub.s32 256, 256
      %25 = vsyncadd [#allocation6], %s24
      %s26 = sshll.u32 [#allocation5], 4
      %s27 = int_to_ptr.vmem [resolvable:$true] %s26
      %32 = dma.hbm_to_vmem [thread:$0]  %s1, 256, %s27, [#allocation6], 128, 128, 8
    $region9: #{tpu_custom_call.1} parent=1 // pred_fallthru
      _
    // Predicated region
    $region10: #{tpu_custom_call.1} parent=1 // pred_check
      _
    $region11: #{tpu_custom_call.1} parent=1 // pred_check_branch
      %34 = sbr.rel (0) target = $region13
    $region12: #{tpu_custom_call.1} parent=1 // pred_region
      _
    $region13: #{tpu_custom_call.1} parent=1 // pred_fallthru
      _
    // Predicated region
    $region14: #{tpu_custom_call.1} parent=1 // pred_check
      _
    $region15: #{tpu_custom_call.1} parent=1 // pred_check_branch
      %36 = sbr.rel (0) target = $region17
    $region16: #{tpu_custom_call.1} parent=1 // pred_region
      %37 = dma.done [#allocation3], 128
    $region17: #{tpu_custom_call.1} parent=1 // pred_fallthru
      _
    // Predicated region
    $region18: #{tpu_custom_call.1} parent=1 // pred_check
      _
    $region19: #{tpu_custom_call.1} parent=1 // pred_check_branch
      %39 = sbr.rel (0) target = $region21
    $region20: #{tpu_custom_call.1} parent=1 // pred_region
      %40 = dma.done [#allocation6], 256
    $region21: #{tpu_custom_call.1} parent=1 // pred_fallthru
      _
    %v41 = vld [vmem:[#allocation2] sm:$0xff]
    %v42 = vld [vmem:[#allocation5] sm:$0xff]
    %v43 = vld [vmem:[#allocation5 + $0x8] sm:$0xff]
    %v44 = vld [vmem:[%s2] sm:$0x1]
    %v46 = vlaneseq
    %v47 = vshrl.u32 %v46, 7
    %v48 = vsub.s32 0, %v47
    %v49 = vrot.slane %v44, %v48
    %vm51 = vcmask 130048
    %v53 = vsel %vm51, %v41, 0
    %55 = vmatprep.subr.mxu0 0.0
    %56 = vmatpush1.msra.mxu0 %v42
    %57 = vmatprep.subr.mxu0 0.0
    %58 = vmatpush1.msra.mxu0 %v43
    %59 = vmatprep.subr.mxu0 0.0
    %60 = vmatpush1.msra.mxu0 0.0
    %61 = vmatprep.subr.mxu0 0.0
    %62 = vmatpush1.msra.mxu0 0.0
    %63 = vmatprep.subr.mxu0 0.0
    %64 = vmatpush1.msra.mxu0 0.0
    %65 = vmatprep.subr.mxu0 0.0
    %66 = vmatpush1.msra.mxu0 0.0
    %67 = vmatprep.subr.mxu0 0.0
    %68 = vmatpush1.msra.mxu0 0.0
    %69 = vmatprep.subr.mxu0 0.0
    %70 = vmatpush1.msra.mxu0 0.0
    %71 = vmatprep.subr.mxu0 0.0
    %72 = vmatpush1.msra.mxu0 0.0
    %73 = vmatprep.subr.mxu0 0.0
    %74 = vmatpush1.msra.mxu0 0.0
    %75 = vmatprep.subr.mxu0 0.0
    %76 = vmatpush1.msra.mxu0 0.0
    %77 = vmatprep.subr.mxu0 0.0
    %78 = vmatpush1.msra.mxu0 0.0
    %79 = vmatprep.subr.mxu0 0.0
    %80 = vmatpush1.msra.mxu0 0.0
    %81 = vmatprep.subr.mxu0 0.0
    %82 = vmatpush1.msra.mxu0 0.0
    %83 = vmatprep.subr.mxu0 0.0
    %84 = vmatpush1.msra.mxu0 0.0
    %85 = vmatprep.subr.mxu0 0.0
    %86 = vmatpush1.msra.mxu0 0.0
    %87 = vmatprep.subr.mxu0 0.0
    %88 = vmatpush1.msra.mxu0 0.0
    %89 = vmatprep.subr.mxu0 0.0
    %90 = vmatpush1.msra.mxu0 0.0
    %91 = vmatprep.subr.mxu0 0.0
    %92 = vmatpush1.msra.mxu0 0.0
    %93 = vmatprep.subr.mxu0 0.0
    %94 = vmatpush1.msra.mxu0 0.0
    %95 = vmatprep.subr.mxu0 0.0
    %96 = vmatpush1.msra.mxu0 0.0
    %97 = vmatprep.subr.mxu0 0.0
    %98 = vmatpush1.msra.mxu0 0.0
    %99 = vmatprep.subr.mxu0 0.0
    %100 = vmatpush1.msra.mxu0 0.0
    %101 = vmatprep.subr.mxu0 0.0
    %102 = vmatpush1.msra.mxu0 0.0
    %103 = vmatprep.subr.mxu0 0.0
    %104 = vmatpush1.msra.mxu0 0.0
    %105 = vmatprep.subr.mxu0 0.0
    %106 = vmatpush1.msra.mxu0 0.0
    %107 = vmatprep.subr.mxu0 0.0
    %108 = vmatpush1.msra.mxu0 0.0
    %109 = vmatprep.subr.mxu0 0.0
    %110 = vmatpush1.msra.mxu0 0.0
    %111 = vmatprep.subr.mxu0 0.0
    %112 = vmatpush1.msra.mxu0 0.0
    %113 = vmatprep.subr.mxu0 0.0
    %114 = vmatpush1.msra.mxu0 0.0
    %115 = vmatprep.subr.mxu0 0.0
    %116 = vmatpush1.msra.mxu0 0.0
    %117 = vmatprep.subr.mxu0 0.0
    %118 = vmatpush1.msra.mxu0 0.0
    %119 = vmatprep.mubr.f32.mxu0 0.0
    %120 = vmatmul.mubr.f32.gmra.mrb[0].mxu0 %v53
    %v121 = vpop.f32.mrb[0].mxu0
    %v122 = vadd.f32 %v49, %v121
    %v123 = vpop.f32.mrb[0].mxu0
    %124 = vdwg.mxu0
    %vm125 = vcmask 146432
    %126 = vst.msk [vmem:[#allocation7] sm:$0xff] %vm125, %v122
    // Predicated region
    $region22: #{tpu_custom_call.1} parent=1 // pred_check
      _
    $region23: #{tpu_custom_call.1} parent=1 // pred_check_branch
      %128 = sbr.rel (0) target = $region25
    $region24: #{tpu_custom_call.1} parent=1 // pred_region
      %s130 = ssub.s32 128, 128
      %131 = vsyncadd [#allocation4], %s130
      %s133 = sshll.u32 [#allocation7], 4
      %s134 = int_to_ptr.vmem [resolvable:$true] %s133
      %136 = dma.vmem_to_hbm [thread:$0]  %s134, 128, %s3, [#allocation4]
    $region25: #{tpu_custom_call.1} parent=1 // pred_fallthru
      _
    // Predicated region
    $region26: #{tpu_custom_call.1} parent=1 // pred_check
      _
    $region27: #{tpu_custom_call.1} parent=1 // pred_check_branch
      %138 = sbr.rel (0) target = $region29
    $region28: #{tpu_custom_call.1} parent=1 // pred_region
      %139 = dma.done [#allocation4], 128
    $region29: #{tpu_custom_call.1} parent=1 // pred_fallthru
      _
    %140 = vsyncpa [#allocation3], 1
    %141 = vsyncpa [#allocation6], 1
    %142 = vsyncpa [#allocation4], 1

</llo_original>
